<compile_context>
chip_gen: v7x
topology: tpu7x:2x2x1
jax: 0.10.0
libtpu: 0.0.40
codegen_flags: <defaults>
</compile_context>

<pallas_src>
import jax
import jax.numpy as jnp
from jax.experimental import pallas as pl
from jax.experimental.pallas import tpu as pltpu

LANE = 128      # feature dims padded to multiples of the 128-lane vreg
SUBLANE = 8     # batch tiles padded to multiples of the 8-sublane vreg


def _round_up(n, m):
    return ((n + m - 1) // m) * m


def predictor_kernel(x_ref, w1_ref, b1_ref, w2_ref, b2_ref,
                     w3_ref, b3_ref, wh_ref, bh_ref,
                     z_ref, y_ref):
    """One (TILE_B, *) batch tile of the Predictor forward pass."""
    cdt = w1_ref.dtype                       # MXU input dtype (bf16 by default)
    x = x_ref[...].astype(cdt)

    # z = embed(x)      (f32 accumulation, f32 bias add)
    z = jnp.dot(x, w1_ref[...], preferred_element_type=jnp.float32) + b1_ref[...]
    z_ref[...] = z.astype(z_ref.dtype)

    # hidden MLP: ReLU -> Linear -> ReLU -> Linear -> ReLU   (ReLU/bias in f32)
    h = jnp.maximum(z, 0.0).astype(cdt)
    h = jnp.dot(h, w2_ref[...], preferred_element_type=jnp.float32) + b2_ref[...]
    h = jnp.maximum(h, 0.0).astype(cdt)
    h = jnp.dot(h, w3_ref[...], preferred_element_type=jnp.float32) + b3_ref[...]
    h = jnp.maximum(h, 0.0).astype(cdt)

    # y = head(h)
    y = jnp.dot(h, wh_ref[...], preferred_element_type=jnp.float32) + bh_ref[...]
    y_ref[...] = y.astype(y_ref.dtype)


def predictor_forward(x, params, *, compute_dtype=jnp.bfloat16, tile_b_max=512):
    """x: (B, in_dim) f32.  params: dict from init_params.  Returns (z, y)."""
    B, in_dim = x.shape
    embed_dim = params["w1"].shape[1]
    half_dim = params["w3"].shape[1]
    out_dim = params["wh"].shape[1]

    # ---- lane/sublane padding (zero padding is exact for this network) ----
    in_p = _round_up(in_dim, LANE)
    e_p = _round_up(embed_dim, LANE)
    h_p = _round_up(half_dim, LANE)
    o_p = _round_up(out_dim, LANE)

    tile_b = min(tile_b_max, _round_up(B, SUBLANE))
    b_p = _round_up(B, tile_b)
    n_tiles = b_p // tile_b

    def pad2(a, r, c):
        return jnp.pad(a, ((0, r - a.shape[0]), (0, c - a.shape[1])))

    x_p = pad2(x, b_p, in_p)
    w1 = pad2(params["w1"], in_p, e_p).astype(compute_dtype)
    w2 = pad2(params["w2"], e_p, e_p).astype(compute_dtype)
    w3 = pad2(params["w3"], e_p, h_p).astype(compute_dtype)
    wh = pad2(params["wh"], h_p, o_p).astype(compute_dtype)
    b1 = pad2(params["b1"], 1, e_p)          # biases stay f32
    b2 = pad2(params["b2"], 1, e_p)
    b3 = pad2(params["b3"], 1, h_p)
    bh = pad2(params["bh"], 1, o_p)

    # Weights/biases: constant index_map -> DMA'd once, resident across the grid.
    def resident(shape):
        return pl.BlockSpec(shape, lambda i: (0, 0))

    in_specs = [
        pl.BlockSpec((tile_b, in_p), lambda i: (i, 0)),   # x tile (double-buffered)
        resident((in_p, e_p)), resident((1, e_p)),        # embed
        resident((e_p, e_p)), resident((1, e_p)),         # layers[1]
        resident((e_p, h_p)), resident((1, h_p)),         # layers[3]
        resident((h_p, o_p)), resident((1, o_p)),         # head
    ]
    out_specs = (
        pl.BlockSpec((tile_b, e_p), lambda i: (i, 0)),    # z tile
        pl.BlockSpec((tile_b, o_p), lambda i: (i, 0)),    # y tile
    )

    # VMEM budget: resident weights + double-buffered x/z/y tiles + headroom.
    w_bytes = (w1.size + w2.size + w3.size + wh.size) * w1.dtype.itemsize
    b_bytes = (b1.size + b2.size + b3.size + bh.size) * 4
    tile_bytes = 2 * 4 * tile_b * (in_p + e_p + o_p)      # double-buffered I/O
    act_bytes = 8 * tile_b * (2 * e_p + h_p)              # in-body intermediates
    vmem_limit = int(min(max(2 * (w_bytes + b_bytes + tile_bytes + act_bytes),
                             16 * 2**20),
                         56 * 2**20))                     # fits v7x's 64 MiB VMEM

    flops = 2 * b_p * (in_p * e_p + e_p * e_p + e_p * h_p + h_p * o_p)
    bytes_accessed = (x_p.size * 4 + w_bytes + b_bytes
                      + b_p * e_p * 4 + b_p * o_p * 4)

    z_p, y_p = pl.pallas_call(
        predictor_kernel,
        grid=(n_tiles,),
        in_specs=in_specs,
        out_specs=out_specs,
        out_shape=(
            jax.ShapeDtypeStruct((b_p, e_p), jnp.float32),  # z (padded)
            jax.ShapeDtypeStruct((b_p, o_p), jnp.float32),  # head(h) (padded)
        ),
        compiler_params=pltpu.CompilerParams(
            dimension_semantics=("parallel",),              # megacore-shard batch
            vmem_limit_bytes=vmem_limit),
        cost_estimate=pl.CostEstimate(
            flops=flops, transcendentals=0, bytes_accessed=bytes_accessed),
    )(x_p, w1, b1, w2, b2, w3, b3, wh, bh)

    # TODO(synk): for very large embed_dim (w2 ~ embed_dim^2*2B resident) add a
    # K-reduction grid axis over w2 with a VMEM f32 accumulator so the resident
    # footprint stays under v7x's 64 MiB VMEM.
    return z_p[:B, :embed_dim], y_p[:B, :out_dim]


def init_params(key, in_dim, embed_dim, out_dim):
    """Deterministic PyTorch-style init: U(-1/sqrt(fan_in), 1/sqrt(fan_in))."""
    half = embed_dim // 2
    keys = jax.random.split(key, 8)

    def lin(kw, kb, fan_in, fan_out):
        bound = 1.0 / jnp.sqrt(jnp.float32(fan_in))
        w = jax.random.uniform(kw, (fan_in, fan_out), jnp.float32, -bound, bound)
        b = jax.random.uniform(kb, (1, fan_out), jnp.float32, -bound, bound)
        return w, b

    w1, b1 = lin(keys[0], keys[1], in_dim, embed_dim)      # embed
    w2, b2 = lin(keys[2], keys[3], embed_dim, embed_dim)   # layers[1]
    w3, b3 = lin(keys[4], keys[5], embed_dim, half)        # layers[3]
    wh, bh = lin(keys[6], keys[7], half, out_dim)          # head
    return dict(w1=w1, b1=b1, w2=w2, b2=b2, w3=w3, b3=b3, wh=wh, bh=bh)


def reference_forward(x, p):
    """Pure-f32 reference (PyTorch semantics)."""
    z = x @ p["w1"] + p["b1"]
    h = jnp.maximum(z, 0.0)
    h = jnp.maximum(h @ p["w2"] + p["b2"], 0.0)
    h = jnp.maximum(h @ p["w3"] + p["b3"], 0.0)
    return z, h @ p["wh"] + p["bh"]


def mirror_reference(x, p, compute_dtype):
    """Reference mirroring the kernel's bf16-MXU / f32-accumulate numerics."""
    def mm(a, w):
        return jnp.dot(a.astype(compute_dtype), w.astype(compute_dtype),
                       preferred_element_type=jnp.float32)
    z = mm(x, p["w1"]) + p["b1"]
    h = jnp.maximum(z, 0.0)
    h = jnp.maximum(mm(h, p["w2"]) + p["b2"], 0.0)
    h = jnp.maximum(mm(h, p["w3"]) + p["b3"], 0.0)
    return z, mm(h, p["wh"]) + p["bh"]


if __name__ == "__main__":
    in_dim, embed_dim, out_dim = 16, 32, 4
    batch = 8

    key = jax.random.PRNGKey(0)
    kx, kp = jax.random.split(key)
    x = jax.random.normal(kx, (batch, in_dim), jnp.float32)
    params = init_params(kp, in_dim, embed_dim, out_dim)

    z, y = predictor_forward(x, params)
    jax.block_until_ready((z, y))

    assert z.shape == (batch, embed_dim) and y.shape == (batch, out_dim)

    # Tight check vs a reference with identical bf16-matmul / f32-accum numerics.
    z_m, y_m = mirror_reference(x, params, jnp.bfloat16)
    assert jnp.allclose(z, z_m, atol=1e-3, rtol=1e-3)
    assert jnp.allclose(y, y_m, atol=1e-3, rtol=1e-3)

    # Loose sanity check vs the pure-f32 PyTorch-semantics reference.
    z_f, y_f = reference_forward(x, params)
    assert jnp.allclose(z, z_f, atol=5e-2, rtol=5e-2)
    assert jnp.allclose(y, y_f, atol=5e-2, rtol=5e-2)

    print("KERNEL_OK")
</pallas_src>

<mosaic_0001>
module attributes {stable_mosaic.version = 11 : i64} {
  func.func @predictor_kernel(%arg0: i32, %arg1: memref<8x128xf32, #tpu.memory_space<vmem>>, %arg2: memref<128x128xbf16, #tpu.memory_space<vmem>>, %arg3: memref<1x128xf32, #tpu.memory_space<vmem>>, %arg4: memref<128x128xbf16, #tpu.memory_space<vmem>>, %arg5: memref<1x128xf32, #tpu.memory_space<vmem>>, %arg6: memref<128x128xbf16, #tpu.memory_space<vmem>>, %arg7: memref<1x128xf32, #tpu.memory_space<vmem>>, %arg8: memref<128x128xbf16, #tpu.memory_space<vmem>>, %arg9: memref<1x128xf32, #tpu.memory_space<vmem>>, %arg10: memref<8x128xf32, #tpu.memory_space<vmem>>, %arg11: memref<8x128xf32, #tpu.memory_space<vmem>>) attributes {dimension_semantics = [#tpu.dimension_semantics<parallel>], iteration_bounds = array<i64: 1>, scalar_prefetch = 0 : i64, scratch_operands = 0 : i64, tpu.core_type = #tpu.core_type<tc>, window_params = [{transform_indices = @transform_0, window_bounds = array<i64: 8, 128>}, {pipeline_mode = #tpu.pipeline_mode<synchronous>, transform_indices = @transform_1, window_bounds = array<i64: 128, 128>}, {pipeline_mode = #tpu.pipeline_mode<synchronous>, transform_indices = @transform_2, window_bounds = array<i64: 1, 128>}, {pipeline_mode = #tpu.pipeline_mode<synchronous>, transform_indices = @transform_3, window_bounds = array<i64: 128, 128>}, {pipeline_mode = #tpu.pipeline_mode<synchronous>, transform_indices = @transform_4, window_bounds = array<i64: 1, 128>}, {pipeline_mode = #tpu.pipeline_mode<synchronous>, transform_indices = @transform_5, window_bounds = array<i64: 128, 128>}, {pipeline_mode = #tpu.pipeline_mode<synchronous>, transform_indices = @transform_6, window_bounds = array<i64: 1, 128>}, {pipeline_mode = #tpu.pipeline_mode<synchronous>, transform_indices = @transform_7, window_bounds = array<i64: 128, 128>}, {pipeline_mode = #tpu.pipeline_mode<synchronous>, transform_indices = @transform_8, window_bounds = array<i64: 1, 128>}, {transform_indices = @transform_9, window_bounds = array<i64: 8, 128>}, {transform_indices = @transform_10, window_bounds = array<i64: 8, 128>}]} {
    %c0 = arith.constant 0 : index
    %c0_0 = arith.constant 0 : index
    %0 = vector.load %arg1[%c0, %c0_0] : memref<8x128xf32, #tpu.memory_space<vmem>>, vector<8x128xf32>
    %1 = arith.truncf %0 : vector<8x128xf32> to vector<8x128xbf16>
    %c0_1 = arith.constant 0 : index
    %c0_2 = arith.constant 0 : index
    %2 = vector.load %arg2[%c0_1, %c0_2] : memref<128x128xbf16, #tpu.memory_space<vmem>>, vector<128x128xbf16>
    %cst = arith.constant dense<0.000000e+00> : vector<8x128xf32>
    %3 = tpu.matmul %1, %2, %cst {dimension_numbers = #tpu.dot_dimension_numbers<[1], [0], [0], [1], [0, 0, 1, 1], [], []>} : vector<8x128xbf16>, vector<128x128xbf16>, vector<8x128xf32> -> vector<8x128xf32>
    %c0_3 = arith.constant 0 : index
    %c0_4 = arith.constant 0 : index
    %4 = vector.load %arg3[%c0_3, %c0_4] : memref<1x128xf32, #tpu.memory_space<vmem>>, vector<1x128xf32>
    %5 = vector.broadcast %4 : vector<1x128xf32> to vector<8x128xf32>
    %6 = arith.addf %3, %5 : vector<8x128xf32>
    %c0_5 = arith.constant 0 : index
    %c0_6 = arith.constant 0 : index
    %7 = vector.load %arg10[%c0_5, %c0_6] : memref<8x128xf32, #tpu.memory_space<vmem>>, vector<8x128xf32>
    tpu.vector_store %arg10[%c0_5, %c0_6], %6 {strides = array<i32>} : memref<8x128xf32, #tpu.memory_space<vmem>>, vector<8x128xf32>,
    %cst_7 = arith.constant 0.000000e+00 : f32
    %8 = vector.broadcast %cst_7 : f32 to vector<8x128xf32>
    %9 = arith.maximumf %6, %8 : vector<8x128xf32>
    %10 = arith.truncf %9 : vector<8x128xf32> to vector<8x128xbf16>
    %c0_8 = arith.constant 0 : index
    %c0_9 = arith.constant 0 : index
    %11 = vector.load %arg4[%c0_8, %c0_9] : memref<128x128xbf16, #tpu.memory_space<vmem>>, vector<128x128xbf16>
    %cst_10 = arith.constant dense<0.000000e+00> : vector<8x128xf32>
    %12 = tpu.matmul %10, %11, %cst_10 {dimension_numbers = #tpu.dot_dimension_numbers<[1], [0], [0], [1], [0, 0, 1, 1], [], []>} : vector<8x128xbf16>, vector<128x128xbf16>, vector<8x128xf32> -> vector<8x128xf32>
    %c0_11 = arith.constant 0 : index
    %c0_12 = arith.constant 0 : index
    %13 = vector.load %arg5[%c0_11, %c0_12] : memref<1x128xf32, #tpu.memory_space<vmem>>, vector<1x128xf32>
    %14 = vector.broadcast %13 : vector<1x128xf32> to vector<8x128xf32>
    %15 = arith.addf %12, %14 : vector<8x128xf32>
    %cst_13 = arith.constant 0.000000e+00 : f32
    %16 = vector.broadcast %cst_13 : f32 to vector<8x128xf32>
    %17 = arith.maximumf %15, %16 : vector<8x128xf32>
    %18 = arith.truncf %17 : vector<8x128xf32> to vector<8x128xbf16>
    %c0_14 = arith.constant 0 : index
    %c0_15 = arith.constant 0 : index
    %19 = vector.load %arg6[%c0_14, %c0_15] : memref<128x128xbf16, #tpu.memory_space<vmem>>, vector<128x128xbf16>
    %cst_16 = arith.constant dense<0.000000e+00> : vector<8x128xf32>
    %20 = tpu.matmul %18, %19, %cst_16 {dimension_numbers = #tpu.dot_dimension_numbers<[1], [0], [0], [1], [0, 0, 1, 1], [], []>} : vector<8x128xbf16>, vector<128x128xbf16>, vector<8x128xf32> -> vector<8x128xf32>
    %c0_17 = arith.constant 0 : index
    %c0_18 = arith.constant 0 : index
    %21 = vector.load %arg7[%c0_17, %c0_18] : memref<1x128xf32, #tpu.memory_space<vmem>>, vector<1x128xf32>
    %22 = vector.broadcast %21 : vector<1x128xf32> to vector<8x128xf32>
    %23 = arith.addf %20, %22 : vector<8x128xf32>
    %cst_19 = arith.constant 0.000000e+00 : f32
    %24 = vector.broadcast %cst_19 : f32 to vector<8x128xf32>
    %25 = arith.maximumf %23, %24 : vector<8x128xf32>
    %26 = arith.truncf %25 : vector<8x128xf32> to vector<8x128xbf16>
    %c0_20 = arith.constant 0 : index
    %c0_21 = arith.constant 0 : index
    %27 = vector.load %arg8[%c0_20, %c0_21] : memref<128x128xbf16, #tpu.memory_space<vmem>>, vector<128x128xbf16>
    %cst_22 = arith.constant dense<0.000000e+00> : vector<8x128xf32>
    %28 = tpu.matmul %26, %27, %cst_22 {dimension_numbers = #tpu.dot_dimension_numbers<[1], [0], [0], [1], [0, 0, 1, 1], [], []>} : vector<8x128xbf16>, vector<128x128xbf16>, vector<8x128xf32> -> vector<8x128xf32>
    %c0_23 = arith.constant 0 : index
    %c0_24 = arith.constant 0 : index
    %29 = vector.load %arg9[%c0_23, %c0_24] : memref<1x128xf32, #tpu.memory_space<vmem>>, vector<1x128xf32>
    %30 = vector.broadcast %29 : vector<1x128xf32> to vector<8x128xf32>
    %31 = arith.addf %28, %30 : vector<8x128xf32>
    %c0_25 = arith.constant 0 : index
    %c0_26 = arith.constant 0 : index
    %32 = vector.load %arg11[%c0_25, %c0_26] : memref<8x128xf32, #tpu.memory_space<vmem>>, vector<8x128xf32>
    tpu.vector_store %arg11[%c0_25, %c0_26], %31 {strides = array<i32>} : memref<8x128xf32, #tpu.memory_space<vmem>>, vector<8x128xf32>,
    return
  }
  func.func @transform_0(%arg0: i32) -> (i32, i32) {
    %c0_i32 = arith.constant 0 : i32
    %c0_i32_0 = arith.constant 0 : i32
    return %arg0, %c0_i32 : i32, i32
  }
  func.func @transform_1(%arg0: i32) -> (i32, i32) {
    %c0_i32 = arith.constant 0 : i32
    %c0_i32_0 = arith.constant 0 : i32
    %c0_i32_1 = arith.constant 0 : i32
    return %c0_i32, %c0_i32_0 : i32, i32
  }
  func.func @transform_2(%arg0: i32) -> (i32, i32) {
    %c0_i32 = arith.constant 0 : i32
    %c0_i32_0 = arith.constant 0 : i32
    %c0_i32_1 = arith.constant 0 : i32
    return %c0_i32, %c0_i32_0 : i32, i32
  }
  func.func @transform_3(%arg0: i32) -> (i32, i32) {
    %c0_i32 = arith.constant 0 : i32
    %c0_i32_0 = arith.constant 0 : i32
    %c0_i32_1 = arith.constant 0 : i32
    return %c0_i32, %c0_i32_0 : i32, i32
  }
  func.func @transform_4(%arg0: i32) -> (i32, i32) {
    %c0_i32 = arith.constant 0 : i32
    %c0_i32_0 = arith.constant 0 : i32
    %c0_i32_1 = arith.constant 0 : i32
    return %c0_i32, %c0_i32_0 : i32, i32
  }
  func.func @transform_5(%arg0: i32) -> (i32, i32) {
    %c0_i32 = arith.constant 0 : i32
    %c0_i32_0 = arith.constant 0 : i32
    %c0_i32_1 = arith.constant 0 : i32
    return %c0_i32, %c0_i32_0 : i32, i32
  }
  func.func @transform_6(%arg0: i32) -> (i32, i32) {
    %c0_i32 = arith.constant 0 : i32
    %c0_i32_0 = arith.constant 0 : i32
    %c0_i32_1 = arith.constant 0 : i32
    return %c0_i32, %c0_i32_0 : i32, i32
  }
  func.func @transform_7(%arg0: i32) -> (i32, i32) {
    %c0_i32 = arith.constant 0 : i32
    %c0_i32_0 = arith.constant 0 : i32
    %c0_i32_1 = arith.constant 0 : i32
    return %c0_i32, %c0_i32_0 : i32, i32
  }
  func.func @transform_8(%arg0: i32) -> (i32, i32) {
    %c0_i32 = arith.constant 0 : i32
    %c0_i32_0 = arith.constant 0 : i32
    %c0_i32_1 = arith.constant 0 : i32
    return %c0_i32, %c0_i32_0 : i32, i32
  }
  func.func @transform_9(%arg0: i32) -> (i32, i32) {
    %c0_i32 = arith.constant 0 : i32
    %c0_i32_0 = arith.constant 0 : i32
    return %arg0, %c0_i32 : i32, i32
  }
  func.func @transform_10(%arg0: i32) -> (i32, i32) {
    %c0_i32 = arith.constant 0 : i32
    %c0_i32_0 = arith.constant 0 : i32
    return %arg0, %c0_i32 : i32, i32
  }
}

</mosaic_0001>

<llo_original>
// kernel: tpu_custom_call.1
$region0: #{tpu_custom_call.1}
  #allocation0 [shape = 'u32[]', space=smem, size = 0x4, offset = 0x4, fixed_abs, tag = 'smem constant byte address 0x4 - core index']
  #allocation1 [shape = 'u32[144,128]{1,0:T(1,128)}', space=vmem, size = 0x12000, scoped, tag = 'internal scratch']
  %s0 = inlined_call_operand.hbm [shape: f32[8,128], index: 0, kind: input, shape index: {}]
  %s1 = inlined_call_operand.hbm [shape: bf16[128,128], index: 1, kind: input, shape index: {}]
  %s2 = inlined_call_operand.vmem [shape: f32[1,128], index: 2, kind: input, shape index: {}]
  %s3 = inlined_call_operand.hbm [shape: bf16[128,128], index: 3, kind: input, shape index: {}]
  %s4 = inlined_call_operand.vmem [shape: f32[1,128], index: 4, kind: input, shape index: {}]
  %s5 = inlined_call_operand.hbm [shape: bf16[128,128], index: 5, kind: input, shape index: {}]
  %s6 = inlined_call_operand.vmem [shape: f32[1,128], index: 6, kind: input, shape index: {}]
  %s7 = inlined_call_operand.hbm [shape: bf16[128,128], index: 7, kind: input, shape index: {}]
  %s8 = inlined_call_operand.vmem [shape: f32[1,128], index: 8, kind: input, shape index: {}]
  %s9 = inlined_call_operand.hbm [shape: f32[8,128], index: 9, kind: output, shape index: {0}]
  %s10 = inlined_call_operand.hbm [shape: f32[8,128], index: 10, kind: output, shape index: {1}]
  %11 = xla_tuple %s9, %s10
  %s12 = sld [smem:[#allocation0]]
  $region74: #{tpu_custom_call.1} parent=0
    _
  %s14 = ssub.s32 1, %s12
  %s15 = scalar_select 0, %s14, %s12
  $region1: #{tpu_custom_call.1} parent=0
    #allocation2 [shape = 'u8[4096]{0}', space=vmem, size = 0x1000, scoped, tag = 'input window, operand 0, single buffered']
    #allocation3 [shape = 's32[1]{0}', space=sflag, size = 0x4, scoped, tag = 'scoped memory for tpu_custom_call.1']
    #allocation4 [shape = 's32[1]{0}', space=sflag, size = 0x4, scoped, tag = 'scoped memory for tpu_custom_call.1']
    #allocation5 [shape = 'u8[32768]{0}', space=vmem, size = 0x8000, scoped, tag = 'input window, operand 1, single buffered']
    #allocation6 [shape = 's32[1]{0}', space=sflag, size = 0x4, scoped, tag = 'scoped memory for tpu_custom_call.1']
    #allocation7 [shape = 'u8[32768]{0}', space=vmem, size = 0x8000, scoped, tag = 'input window, operand 3, single buffered']
    #allocation8 [shape = 'u8[32768]{0}', space=vmem, size = 0x8000, scoped, tag = 'input window, operand 5, single buffered']
    #allocation9 [shape = 's32[1]{0}', space=sflag, size = 0x4, scoped, tag = 'scoped memory for tpu_custom_call.1']
    #allocation10 [shape = 'u8[32768]{0}', space=vmem, size = 0x8000, scoped, tag = 'input window, operand 7, single buffered']
    #allocation11 [shape = 'u8[4096]{0}', space=vmem, size = 0x1000, scoped, tag = 'output window, operand 0, single buffered']
    #allocation12 [shape = 'u8[4096]{0}', space=vmem, size = 0x1000, scoped, tag = 'output window, operand 1, single buffered']
    #allocation13 [shape = 's32[1]{0}', space=sflag, size = 0x4, scoped, tag = 'scoped memory for tpu_custom_call.1']
    %16 = vsyncpa [#allocation3], 0
    %17 = vsyncpa [#allocation6], 0
    %18 = vsyncpa [#allocation9], 0
    %19 = vsyncpa [#allocation4], 0
    %20 = vsyncpa [#allocation13], 0
    // Predicated region
    $region2: #{tpu_custom_call.1} parent=1 // pred_check
      _
    $region3: #{tpu_custom_call.1} parent=1 // pred_check_branch
      %22 = sbr.rel (0) target = $region5
    $region4: #{tpu_custom_call.1} parent=1 // pred_region
      %s24 = ssub.s32 128, 128
      %25 = vsyncadd [#allocation3], %s24
      %s27 = sshll.u32 [#allocation2], 4
      %s28 = int_to_ptr.vmem [resolvable:$true] %s27
      %30 = dma.hbm_to_vmem [thread:$0]  %s0, 128, %s28, [#allocation3]
    $region5: #{tpu_custom_call.1} parent=1 // pred_fallthru
      _
    // Predicated region
    $region6: #{tpu_custom_call.1} parent=1 // pred_check
      _
    $region7: #{tpu_custom_call.1} parent=1 // pred_check_branch
      %32 = sbr.rel (0) target = $region9
    $region8: #{tpu_custom_call.1} parent=1 // pred_region
      %s34 = ssub.s32 1024, 1024
      %35 = vsyncadd [#allocation6], %s34
      %s36 = sshll.u32 [#allocation5], 4
      %s37 = int_to_ptr.vmem [resolvable:$true] %s36
      %42 = dma.hbm_to_vmem [thread:$0]  %s1, 1024, %s37, [#allocation6], 64, 64, 4
    $region9: #{tpu_custom_call.1} parent=1 // pred_fallthru
      _
    // Predicated region
    $region10: #{tpu_custom_call.1} parent=1 // pred_check
      _
    $region11: #{tpu_custom_call.1} parent=1 // pred_check_branch
      %44 = sbr.rel (0) target = $region13
    $region12: #{tpu_custom_call.1} parent=1 // pred_region
      _
    $region13: #{tpu_custom_call.1} parent=1 // pred_fallthru
      _
    // Predicated region
    $region14: #{tpu_custom_call.1} parent=1 // pred_check
      _
    $region15: #{tpu_custom_call.1} parent=1 // pred_check_branch
      %46 = sbr.rel (0) target = $region17
    $region16: #{tpu_custom_call.1} parent=1 // pred_region
      %s48 = ssub.s32 1024, 1024
      %49 = vsyncadd [#allocation6], %s48
      %s50 = sshll.u32 [#allocation7], 4
      %s51 = int_to_ptr.vmem [resolvable:$true] %s50
      %56 = dma.hbm_to_vmem [thread:$0]  %s3, 1024, %s51, [#allocation6], 64, 64, 4
    $region17: #{tpu_custom_call.1} parent=1 // pred_fallthru
      _
    // Predicated region
    $region18: #{tpu_custom_call.1} parent=1 // pred_check
      _
    $region19: #{tpu_custom_call.1} parent=1 // pred_check_branch
      %58 = sbr.rel (0) target = $region21
    $region20: #{tpu_custom_call.1} parent=1 // pred_region
      _
    $region21: #{tpu_custom_call.1} parent=1 // pred_fallthru
      _
    // Predicated region
    $region22: #{tpu_custom_call.1} parent=1 // pred_check
      _
    $region23: #{tpu_custom_call.1} parent=1 // pred_check_branch
      %60 = sbr.rel (0) target = $region25
    $region24: #{tpu_custom_call.1} parent=1 // pred_region
      %s62 = ssub.s32 1024, 1024
      %63 = vsyncadd [#allocation9], %s62
      %s64 = sshll.u32 [#allocation8], 4
      %s65 = int_to_ptr.vmem [resolvable:$true] %s64
      %70 = dma.hbm_to_vmem [thread:$0]  %s5, 1024, %s65, [#allocation9], 64, 64, 4
    $region25: #{tpu_custom_call.1} parent=1 // pred_fallthru
      _
    // Predicated region
    $region26: #{tpu_custom_call.1} parent=1 // pred_check
      _
    $region27: #{tpu_custom_call.1} parent=1 // pred_check_branch
      %72 = sbr.rel (0) target = $region29
    $region28: #{tpu_custom_call.1} parent=1 // pred_region
      _
    $region29: #{tpu_custom_call.1} parent=1 // pred_fallthru
      _
    // Predicated region
    $region30: #{tpu_custom_call.1} parent=1 // pred_check
      _
    $region31: #{tpu_custom_call.1} parent=1 // pred_check_branch
      %74 = sbr.rel (0) target = $region33
    $region32: #{tpu_custom_call.1} parent=1 // pred_region
      %s76 = ssub.s32 1024, 1024
      %77 = vsyncadd [#allocation9], %s76
      %s78 = sshll.u32 [#allocation10], 4
      %s79 = int_to_ptr.vmem [resolvable:$true] %s78
      %84 = dma.hbm_to_vmem [thread:$0]  %s7, 1024, %s79, [#allocation9], 64, 64, 4
    $region33: #{tpu_custom_call.1} parent=1 // pred_fallthru
      _
    // Predicated region
    $region34: #{tpu_custom_call.1} parent=1 // pred_check
      _
    $region35: #{tpu_custom_call.1} parent=1 // pred_check_branch
      %86 = sbr.rel (0) target = $region37
    $region36: #{tpu_custom_call.1} parent=1 // pred_region
      _
    $region37: #{tpu_custom_call.1} parent=1 // pred_fallthru
      _
    // Predicated region
    $region38: #{tpu_custom_call.1} parent=1 // pred_check
      _
    $region39: #{tpu_custom_call.1} parent=1 // pred_check_branch
      %88 = sbr.rel (0) target = $region41
    $region40: #{tpu_custom_call.1} parent=1 // pred_region
      %89 = dma.done [#allocation3], 128
    $region41: #{tpu_custom_call.1} parent=1 // pred_fallthru
      _
    // Predicated region
    $region42: #{tpu_custom_call.1} parent=1 // pred_check
      _
    $region43: #{tpu_custom_call.1} parent=1 // pred_check_branch
      %91 = sbr.rel (0) target = $region45
    $region44: #{tpu_custom_call.1} parent=1 // pred_region
      %92 = dma.done [#allocation6], 1024
    $region45: #{tpu_custom_call.1} parent=1 // pred_fallthru
      _
    // Predicated region
    $region46: #{tpu_custom_call.1} parent=1 // pred_check
      _
    $region47: #{tpu_custom_call.1} parent=1 // pred_check_branch
      %94 = sbr.rel (0) target = $region49
    $region48: #{tpu_custom_call.1} parent=1 // pred_region
      %95 = dma.done [#allocation6], 1024
    $region49: #{tpu_custom_call.1} parent=1 // pred_fallthru
      _
    // Predicated region
    $region50: #{tpu_custom_call.1} parent=1 // pred_check
      _
    $region51: #{tpu_custom_call.1} parent=1 // pred_check_branch
      %97 = sbr.rel (0) target = $region53
    $region52: #{tpu_custom_call.1} parent=1 // pred_region
      %98 = dma.done [#allocation9], 1024
    $region53: #{tpu_custom_call.1} parent=1 // pred_fallthru
      _
    // Predicated region
    $region54: #{tpu_custom_call.1} parent=1 // pred_check
      _
    $region55: #{tpu_custom_call.1} parent=1 // pred_check_branch
      %100 = sbr.rel (0) target = $region57
    $region56: #{tpu_custom_call.1} parent=1 // pred_region
      %101 = dma.done [#allocation9], 1024
    $region57: #{tpu_custom_call.1} parent=1 // pred_fallthru
      _
    %v103 = vld [vmem:[#allocation2] sm:$0xff]
    %v104 = vpack.c.bf16 %v103, %v103
    %v105 = vld [vmem:[#allocation5] sm:$0xf]
    %v106 = vld [vmem:[#allocation5 + $0x4] sm:$0xf]
    %v107 = vld [vmem:[#allocation5 + $0x8] sm:$0xf]
    %v108 = vld [vmem:[#allocation5 + $0xc] sm:$0xf]
    %v109 = vld [vmem:[#allocation5 + $0x10] sm:$0xf]
    %v110 = vld [vmem:[#allocation5 + $0x14] sm:$0xf]
    %v111 = vld [vmem:[#allocation5 + $0x18] sm:$0xf]
    %v112 = vld [vmem:[#allocation5 + $0x1c] sm:$0xf]
    %v113 = vld [vmem:[#allocation5 + $0x20] sm:$0xf]
    %v114 = vld [vmem:[#allocation5 + $0x24] sm:$0xf]
    %v115 = vld [vmem:[#allocation5 + $0x28] sm:$0xf]
    %v116 = vld [vmem:[#allocation5 + $0x2c] sm:$0xf]
    %v117 = vld [vmem:[#allocation5 + $0x30] sm:$0xf]
    %v118 = vld [vmem:[#allocation5 + $0x34] sm:$0xf]
    %v119 = vld [vmem:[#allocation5 + $0x38] sm:$0xf]
    %v120 = vld [vmem:[#allocation5 + $0x3c] sm:$0xf]
    %v121 = vld [vmem:[%s2] sm:$0x1]
    %v123 = vlaneseq
    %v124 = vshrl.u32 %v123, 7
    %v125 = vsub.s32 0, %v124
    %v126 = vrot.slane %v121, %v125
    %v144 = vunpack.c.l.b16 %v105
    %v145 = vunpack.c.l.b16 %v106
    %v146 = vunpack.c.l.b16 %v107
    %v147 = vunpack.c.l.b16 %v108
    %v148 = vunpack.c.l.b16 %v109
    %v149 = vunpack.c.l.b16 %v110
    %v150 = vunpack.c.l.b16 %v111
    %v151 = vunpack.c.l.b16 %v112
    %v152 = vunpack.c.l.b16 %v113
    %v153 = vunpack.c.l.b16 %v114
    %v154 = vunpack.c.l.b16 %v115
    %v155 = vunpack.c.l.b16 %v116
    %v156 = vunpack.c.l.b16 %v117
    %v157 = vunpack.c.l.b16 %v118
    %v158 = vunpack.c.l.b16 %v119
    %v159 = vunpack.c.l.b16 %v120
    %v160 = vpack.c.b16 %v145, %v144
    %v161 = vpack.c.b16 %v147, %v146
    %v162 = vpack.c.b16 %v149, %v148
    %v163 = vpack.c.b16 %v151, %v150
    %v164 = vpack.c.b16 %v153, %v152
    %v165 = vpack.c.b16 %v155, %v154
    %v166 = vpack.c.b16 %v157, %v156
    %v167 = vpack.c.b16 %v159, %v158
    %176 = vmatprep.subr.bf16.mxu0 0
    %177 = vmatpush1.bf16.msra.mxu0 %v160
    %178 = vmatprep.subr.bf16.mxu0 0
    %179 = vmatpush1.bf16.msra.mxu0 %v161
    %180 = vmatprep.subr.bf16.mxu0 0
    %181 = vmatpush1.bf16.msra.mxu0 %v162
    %182 = vmatprep.subr.bf16.mxu0 0
    %183 = vmatpush1.bf16.msra.mxu0 %v163
    %184 = vmatprep.subr.bf16.mxu0 0
    %185 = vmatpush1.bf16.msra.mxu0 %v164
    %186 = vmatprep.subr.bf16.mxu0 0
    %187 = vmatpush1.bf16.msra.mxu0 %v165
    %188 = vmatprep.subr.bf16.mxu0 0
    %189 = vmatpush1.bf16.msra.mxu0 %v166
    %190 = vmatprep.subr.bf16.mxu0 0
    %191 = vmatpush1.bf16.msra.mxu0 %v167
    %192 = vmatprep.subr.bf16.mxu0 0
    %193 = vmatpush1.bf16.msra.mxu0 0
    %194 = vmatprep.subr.bf16.mxu0 0
    %195 = vmatpush1.bf16.msra.mxu0 0
    %196 = vmatprep.subr.bf16.mxu0 0
    %197 = vmatpush1.bf16.msra.mxu0 0
    %198 = vmatprep.subr.bf16.mxu0 0
    %199 = vmatpush1.bf16.msra.mxu0 0
    %200 = vmatprep.subr.bf16.mxu0 0
    %201 = vmatpush1.bf16.msra.mxu0 0
    %202 = vmatprep.subr.bf16.mxu0 0
    %203 = vmatpush1.bf16.msra.mxu0 0
    %204 = vmatprep.subr.bf16.mxu0 0
    %205 = vmatpush1.bf16.msra.mxu0 0
    %206 = vmatprep.subr.bf16.mxu0 0
    %207 = vmatpush1.bf16.msra.mxu0 0
    %208 = vmatprep.mubr.bf16.mxu0 0
    %209 = vmatmul.mubr.bf16.gmra.mrb[0].mxu0 %v104
    %v210 = vpop.f32.mrb[0].mxu0
    %v211 = vadd.f32 %v126, %v210
    %v212 = vpop.f32.mrb[0].mxu0
    %v213 = vpop.f32.mrb[0].mxu0
    %v214 = vpop.f32.mrb[0].mxu0
    %215 = vdwg.mxu0
    %216 = vst [vmem:[#allocation11] sm:$0xff] %v211
    %v217 = vmax.f32 %v211, 0.0
    %v218 = vpack.c.bf16 %v217, %v217
    %v219 = vld [vmem:[#allocation7] sm:$0xf]
    %v220 = vld [vmem:[#allocation7 + $0x4] sm:$0xf]
    %v221 = vld [vmem:[#allocation7 + $0x8] sm:$0xf]
    %v222 = vld [vmem:[#allocation7 + $0xc] sm:$0xf]
    %v223 = vld [vmem:[#allocation7 + $0x10] sm:$0xf]
    %v224 = vld [vmem:[#allocation7 + $0x14] sm:$0xf]
    %v225 = vld [vmem:[#allocation7 + $0x18] sm:$0xf]
    %v226 = vld [vmem:[#allocation7 + $0x1c] sm:$0xf]
    %v227 = vld [vmem:[#allocation7 + $0x20] sm:$0xf]
    %v228 = vld [vmem:[#allocation7 + $0x24] sm:$0xf]
    %v229 = vld [vmem:[#allocation7 + $0x28] sm:$0xf]
    %v230 = vld [vmem:[#allocation7 + $0x2c] sm:$0xf]
    %v231 = vld [vmem:[#allocation7 + $0x30] sm:$0xf]
    %v232 = vld [vmem:[#allocation7 + $0x34] sm:$0xf]
    %v233 = vld [vmem:[#allocation7 + $0x38] sm:$0xf]
    %v234 = vld [vmem:[#allocation7 + $0x3c] sm:$0xf]
    %v235 = vld [vmem:[%s4] sm:$0x1]
    %v237 = vlaneseq
    %v238 = vshrl.u32 %v237, 7
    %v239 = vsub.s32 0, %v238
    %v240 = vrot.slane %v235, %v239
    %v258 = vunpack.c.l.b16 %v219
    %v259 = vunpack.c.l.b16 %v220
    %v260 = vunpack.c.l.b16 %v221
    %v261 = vunpack.c.l.b16 %v222
    %v262 = vunpack.c.l.b16 %v223
    %v263 = vunpack.c.l.b16 %v224
    %v264 = vunpack.c.l.b16 %v225
    %v265 = vunpack.c.l.b16 %v226
    %v266 = vunpack.c.l.b16 %v227
    %v267 = vunpack.c.l.b16 %v228
    %v268 = vunpack.c.l.b16 %v229
    %v269 = vunpack.c.l.b16 %v230
    %v270 = vunpack.c.l.b16 %v231
    %v271 = vunpack.c.l.b16 %v232
    %v272 = vunpack.c.l.b16 %v233
    %v273 = vunpack.c.l.b16 %v234
    %v274 = vpack.c.b16 %v259, %v258
    %v275 = vpack.c.b16 %v261, %v260
    %v276 = vpack.c.b16 %v263, %v262
    %v277 = vpack.c.b16 %v265, %v264
    %v278 = vpack.c.b16 %v267, %v266
    %v279 = vpack.c.b16 %v269, %v268
    %v280 = vpack.c.b16 %v271, %v270
    %v281 = vpack.c.b16 %v273, %v272
    %290 = vmatprep.subr.bf16.mxu0 0
    %291 = vmatpush1.bf16.msra.mxu0 %v274
    %292 = vmatprep.subr.bf16.mxu0 0
    %293 = vmatpush1.bf16.msra.mxu0 %v275
    %294 = vmatprep.subr.bf16.mxu0 0
    %295 = vmatpush1.bf16.msra.mxu0 %v276
    %296 = vmatprep.subr.bf16.mxu0 0
    %297 = vmatpush1.bf16.msra.mxu0 %v277
    %298 = vmatprep.subr.bf16.mxu0 0
    %299 = vmatpush1.bf16.msra.mxu0 %v278
    %300 = vmatprep.subr.bf16.mxu0 0
    %301 = vmatpush1.bf16.msra.mxu0 %v279
    %302 = vmatprep.subr.bf16.mxu0 0
    %303 = vmatpush1.bf16.msra.mxu0 %v280
    %304 = vmatprep.subr.bf16.mxu0 0
    %305 = vmatpush1.bf16.msra.mxu0 %v281
    %306 = vmatprep.subr.bf16.mxu0 0
    %307 = vmatpush1.bf16.msra.mxu0 0
    %308 = vmatprep.subr.bf16.mxu0 0
    %309 = vmatpush1.bf16.msra.mxu0 0
    %310 = vmatprep.subr.bf16.mxu0 0
    %311 = vmatpush1.bf16.msra.mxu0 0
    %312 = vmatprep.subr.bf16.mxu0 0
    %313 = vmatpush1.bf16.msra.mxu0 0
    %314 = vmatprep.subr.bf16.mxu0 0
    %315 = vmatpush1.bf16.msra.mxu0 0
    %316 = vmatprep.subr.bf16.mxu0 0
    %317 = vmatpush1.bf16.msra.mxu0 0
    %318 = vmatprep.subr.bf16.mxu0 0
    %319 = vmatpush1.bf16.msra.mxu0 0
    %320 = vmatprep.subr.bf16.mxu0 0
    %321 = vmatpush1.bf16.msra.mxu0 0
    %322 = vmatprep.mubr.bf16.mxu0 0
    %323 = vmatmul.mubr.bf16.gmra.mrb[0].mxu0 %v218
    %v324 = vpop.f32.mrb[0].mxu0
    %v325 = vadd.f32 %v240, %v324
    %v326 = vpop.f32.mrb[0].mxu0
    %v327 = vpop.f32.mrb[0].mxu0
    %v328 = vpop.f32.mrb[0].mxu0
    %329 = vdwg.mxu0
    %v330 = vmax.f32 %v325, 0.0
    %v331 = vpack.c.bf16 %v330, %v330
    %v332 = vld [vmem:[#allocation8] sm:$0xf]
    %v333 = vld [vmem:[#allocation8 + $0x4] sm:$0xf]
    %v334 = vld [vmem:[#allocation8 + $0x8] sm:$0xf]
    %v335 = vld [vmem:[#allocation8 + $0xc] sm:$0xf]
    %v336 = vld [vmem:[#allocation8 + $0x10] sm:$0xf]
    %v337 = vld [vmem:[#allocation8 + $0x14] sm:$0xf]
    %v338 = vld [vmem:[#allocation8 + $0x18] sm:$0xf]
    %v339 = vld [vmem:[#allocation8 + $0x1c] sm:$0xf]
    %v340 = vld [vmem:[#allocation8 + $0x20] sm:$0xf]
    %v341 = vld [vmem:[#allocation8 + $0x24] sm:$0xf]
    %v342 = vld [vmem:[#allocation8 + $0x28] sm:$0xf]
    %v343 = vld [vmem:[#allocation8 + $0x2c] sm:$0xf]
    %v344 = vld [vmem:[#allocation8 + $0x30] sm:$0xf]
    %v345 = vld [vmem:[#allocation8 + $0x34] sm:$0xf]
    %v346 = vld [vmem:[#allocation8 + $0x38] sm:$0xf]
    %v347 = vld [vmem:[#allocation8 + $0x3c] sm:$0xf]
    %v348 = vld [vmem:[%s6] sm:$0x1]
    %v350 = vlaneseq
    %v351 = vshrl.u32 %v350, 7
    %v352 = vsub.s32 0, %v351
    %v353 = vrot.slane %v348, %v352
    %v371 = vunpack.c.l.b16 %v332
    %v372 = vunpack.c.l.b16 %v333
    %v373 = vunpack.c.l.b16 %v334
    %v374 = vunpack.c.l.b16 %v335
    %v375 = vunpack.c.l.b16 %v336
    %v376 = vunpack.c.l.b16 %v337
    %v377 = vunpack.c.l.b16 %v338
    %v378 = vunpack.c.l.b16 %v339
    %v379 = vunpack.c.l.b16 %v340
    %v380 = vunpack.c.l.b16 %v341
    %v381 = vunpack.c.l.b16 %v342
    %v382 = vunpack.c.l.b16 %v343
    %v383 = vunpack.c.l.b16 %v344
    %v384 = vunpack.c.l.b16 %v345
    %v385 = vunpack.c.l.b16 %v346
    %v386 = vunpack.c.l.b16 %v347
    %v387 = vpack.c.b16 %v372, %v371
    %v388 = vpack.c.b16 %v374, %v373
    %v389 = vpack.c.b16 %v376, %v375
    %v390 = vpack.c.b16 %v378, %v377
    %v391 = vpack.c.b16 %v380, %v379
    %v392 = vpack.c.b16 %v382, %v381
    %v393 = vpack.c.b16 %v384, %v383
    %v394 = vpack.c.b16 %v386, %v385
    %403 = vmatprep.subr.bf16.mxu0 0
    %404 = vmatpush1.bf16.msra.mxu0 %v387
    %405 = vmatprep.subr.bf16.mxu0 0
    %406 = vmatpush1.bf16.msra.mxu0 %v388
    %407 = vmatprep.subr.bf16.mxu0 0
    %408 = vmatpush1.bf16.msra.mxu0 %v389
    %409 = vmatprep.subr.bf16.mxu0 0
    %410 = vmatpush1.bf16.msra.mxu0 %v390
    %411 = vmatprep.subr.bf16.mxu0 0
    %412 = vmatpush1.bf16.msra.mxu0 %v391
    %413 = vmatprep.subr.bf16.mxu0 0
    %414 = vmatpush1.bf16.msra.mxu0 %v392
    %415 = vmatprep.subr.bf16.mxu0 0
    %416 = vmatpush1.bf16.msra.mxu0 %v393
    %417 = vmatprep.subr.bf16.mxu0 0
    %418 = vmatpush1.bf16.msra.mxu0 %v394
    %419 = vmatprep.subr.bf16.mxu0 0
    %420 = vmatpush1.bf16.msra.mxu0 0
    %421 = vmatprep.subr.bf16.mxu0 0
    %422 = vmatpush1.bf16.msra.mxu0 0
    %423 = vmatprep.subr.bf16.mxu0 0
    %424 = vmatpush1.bf16.msra.mxu0 0
    %425 = vmatprep.subr.bf16.mxu0 0
    %426 = vmatpush1.bf16.msra.mxu0 0
    %427 = vmatprep.subr.bf16.mxu0 0
    %428 = vmatpush1.bf16.msra.mxu0 0
    %429 = vmatprep.subr.bf16.mxu0 0
    %430 = vmatpush1.bf16.msra.mxu0 0
    %431 = vmatprep.subr.bf16.mxu0 0
    %432 = vmatpush1.bf16.msra.mxu0 0
    %433 = vmatprep.subr.bf16.mxu0 0
    %434 = vmatpush1.bf16.msra.mxu0 0
    %435 = vmatprep.mubr.bf16.mxu0 0
    %436 = vmatmul.mubr.bf16.gmra.mrb[0].mxu0 %v331
    %v437 = vpop.f32.mrb[0].mxu0
    %v438 = vadd.f32 %v353, %v437
    %v439 = vpop.f32.mrb[0].mxu0
    %v440 = vpop.f32.mrb[0].mxu0
    %v441 = vpop.f32.mrb[0].mxu0
    %442 = vdwg.mxu0
    %v443 = vmax.f32 %v438, 0.0
    %v444 = vpack.c.bf16 %v443, %v443
    %v445 = vld [vmem:[#allocation10] sm:$0xf]
    %v446 = vld [vmem:[#allocation10 + $0x4] sm:$0xf]
    %v447 = vld [vmem:[#allocation10 + $0x8] sm:$0xf]
    %v448 = vld [vmem:[#allocation10 + $0xc] sm:$0xf]
    %v449 = vld [vmem:[#allocation10 + $0x10] sm:$0xf]
    %v450 = vld [vmem:[#allocation10 + $0x14] sm:$0xf]
    %v451 = vld [vmem:[#allocation10 + $0x18] sm:$0xf]
    %v452 = vld [vmem:[#allocation10 + $0x1c] sm:$0xf]
    %v453 = vld [vmem:[#allocation10 + $0x20] sm:$0xf]
    %v454 = vld [vmem:[#allocation10 + $0x24] sm:$0xf]
    %v455 = vld [vmem:[#allocation10 + $0x28] sm:$0xf]
    %v456 = vld [vmem:[#allocation10 + $0x2c] sm:$0xf]
    %v457 = vld [vmem:[#allocation10 + $0x30] sm:$0xf]
    %v458 = vld [vmem:[#allocation10 + $0x34] sm:$0xf]
    %v459 = vld [vmem:[#allocation10 + $0x38] sm:$0xf]
    %v460 = vld [vmem:[#allocation10 + $0x3c] sm:$0xf]
    %v461 = vld [vmem:[%s8] sm:$0x1]
    %v463 = vlaneseq
    %v464 = vshrl.u32 %v463, 7
    %v465 = vsub.s32 0, %v464
    %v466 = vrot.slane %v461, %v465
    %v484 = vunpack.c.l.b16 %v445
    %v485 = vunpack.c.l.b16 %v446
    %v486 = vunpack.c.l.b16 %v447
    %v487 = vunpack.c.l.b16 %v448
    %v488 = vunpack.c.l.b16 %v449
    %v489 = vunpack.c.l.b16 %v450
    %v490 = vunpack.c.l.b16 %v451
    %v491 = vunpack.c.l.b16 %v452
    %v492 = vunpack.c.l.b16 %v453
    %v493 = vunpack.c.l.b16 %v454
    %v494 = vunpack.c.l.b16 %v455
    %v495 = vunpack.c.l.b16 %v456
    %v496 = vunpack.c.l.b16 %v457
    %v497 = vunpack.c.l.b16 %v458
    %v498 = vunpack.c.l.b16 %v459
    %v499 = vunpack.c.l.b16 %v460
    %v500 = vpack.c.b16 %v485, %v484
    %v501 = vpack.c.b16 %v487, %v486
    %v502 = vpack.c.b16 %v489, %v488
    %v503 = vpack.c.b16 %v491, %v490
    %v504 = vpack.c.b16 %v493, %v492
    %v505 = vpack.c.b16 %v495, %v494
    %v506 = vpack.c.b16 %v497, %v496
    %v507 = vpack.c.b16 %v499, %v498
    %516 = vmatprep.subr.bf16.mxu0 0
    %517 = vmatpush1.bf16.msra.mxu0 %v500
    %518 = vmatprep.subr.bf16.mxu0 0
    %519 = vmatpush1.bf16.msra.mxu0 %v501
    %520 = vmatprep.subr.bf16.mxu0 0
    %521 = vmatpush1.bf16.msra.mxu0 %v502
    %522 = vmatprep.subr.bf16.mxu0 0
    %523 = vmatpush1.bf16.msra.mxu0 %v503
    %524 = vmatprep.subr.bf16.mxu0 0
    %525 = vmatpush1.bf16.msra.mxu0 %v504
    %526 = vmatprep.subr.bf16.mxu0 0
    %527 = vmatpush1.bf16.msra.mxu0 %v505
    %528 = vmatprep.subr.bf16.mxu0 0
    %529 = vmatpush1.bf16.msra.mxu0 %v506
    %530 = vmatprep.subr.bf16.mxu0 0
    %531 = vmatpush1.bf16.msra.mxu0 %v507
    %532 = vmatprep.subr.bf16.mxu0 0
    %533 = vmatpush1.bf16.msra.mxu0 0
    %534 = vmatprep.subr.bf16.mxu0 0
    %535 = vmatpush1.bf16.msra.mxu0 0
    %536 = vmatprep.subr.bf16.mxu0 0
    %537 = vmatpush1.bf16.msra.mxu0 0
    %538 = vmatprep.subr.bf16.mxu0 0
    %539 = vmatpush1.bf16.msra.mxu0 0
    %540 = vmatprep.subr.bf16.mxu0 0
    %541 = vmatpush1.bf16.msra.mxu0 0
    %542 = vmatprep.subr.bf16.mxu0 0
    %543 = vmatpush1.bf16.msra.mxu0 0
    %544 = vmatprep.subr.bf16.mxu0 0
    %545 = vmatpush1.bf16.msra.mxu0 0
    %546 = vmatprep.subr.bf16.mxu0 0
    %547 = vmatpush1.bf16.msra.mxu0 0
    %548 = vmatprep.mubr.bf16.mxu0 0
    %549 = vmatmul.mubr.bf16.gmra.mrb[0].mxu0 %v444
    %v550 = vpop.f32.mrb[0].mxu0
    %v551 = vadd.f32 %v466, %v550
    %v552 = vpop.f32.mrb[0].mxu0
    %v553 = vpop.f32.mrb[0].mxu0
    %v554 = vpop.f32.mrb[0].mxu0
    %555 = vdwg.mxu0
    %556 = vst [vmem:[#allocation12] sm:$0xff] %v551
    // Predicated region
    $region58: #{tpu_custom_call.1} parent=1 // pred_check
      _
    $region59: #{tpu_custom_call.1} parent=1 // pred_check_branch
      %558 = sbr.rel (0) target = $region61
    $region60: #{tpu_custom_call.1} parent=1 // pred_region
      %s560 = ssub.s32 128, 128
      %561 = vsyncadd [#allocation4], %s560
      %s563 = sshll.u32 [#allocation11], 4
      %s564 = int_to_ptr.vmem [resolvable:$true] %s563
      %566 = dma.vmem_to_hbm [thread:$0]  %s564, 128, %s9, [#allocation4]
    $region61: #{tpu_custom_call.1} parent=1 // pred_fallthru
      _
    // Predicated region
    $region62: #{tpu_custom_call.1} parent=1 // pred_check
      _
    $region63: #{tpu_custom_call.1} parent=1 // pred_check_branch
      %568 = sbr.rel (0) target = $region65
    $region64: #{tpu_custom_call.1} parent=1 // pred_region
      %s570 = ssub.s32 128, 128
      %571 = vsyncadd [#allocation13], %s570
      %s573 = sshll.u32 [#allocation12], 4
      %s574 = int_to_ptr.vmem [resolvable:$true] %s573
      %576 = dma.vmem_to_hbm [thread:$0]  %s574, 128, %s10, [#allocation13]
    $region65: #{tpu_custom_call.1} parent=1 // pred_fallthru
      _
    // Predicated region
    $region66: #{tpu_custom_call.1} parent=1 // pred_check
      _
    $region67: #{tpu_custom_call.1} parent=1 // pred_check_branch
      %578 = sbr.rel (0) target = $region69
    $region68: #{tpu_custom_call.1} parent=1 // pred_region
      %579 = dma.done [#allocation4], 128
    $region69: #{tpu_custom_call.1} parent=1 // pred_fallthru
      _
    // Predicated region
    $region70: #{tpu_custom_call.1} parent=1 // pred_check
      _
    $region71: #{tpu_custom_call.1} parent=1 // pred_check_branch
      %581 = sbr.rel (0) target = $region73
    $region72: #{tpu_custom_call.1} parent=1 // pred_region
      %582 = dma.done [#allocation13], 128
    $region73: #{tpu_custom_call.1} parent=1 // pred_fallthru
      _
    %583 = vsyncpa [#allocation3], 1
    %584 = vsyncpa [#allocation6], 1
    %585 = vsyncpa [#allocation9], 1
    %586 = vsyncpa [#allocation4], 1
    %587 = vsyncpa [#allocation13], 1

</llo_original>
